<compile_context>
chip_gen: v7x
topology: tpu7x:2x2x1
jax: 0.10.0
libtpu: 0.0.40
codegen_flags: <defaults>
</compile_context>

<pallas_src>
import jax
import jax.numpy as jnp
from jax import lax
from jax.experimental import pallas as pl
from jax.experimental.pallas import tpu as pltpu


# Offsets of each layer's weights / biases in the packed parameter vector.
_W1, _B1 = 0, 10       # w1: [5,2] -> 10 floats, b1: [5]
_W2, _B2 = 15, 40      # w2: [5,5] -> 25 floats, b2: [5]
_W3, _B3 = 45, 70      # w3: [5,5] -> 25 floats, b3: [5]
_W4, _B4 = 75, 80      # w4: [1,5] ->  5 floats, b4: [1]
_NPARAMS = 81

_LANES = 128
_CHUNK_ROWS = 8                      # one vreg of sublanes per chunk
_ROW_ALIGN = _CHUNK_ROWS * _LANES    # 1024: batch-tile granularity


def mlp_kernel(p_ref, x_ref, o_ref):
    """p_ref: [81] f32 SMEM; x_ref: [2, rows, 128] f32; o_ref: [rows, 128] f32."""

    # Hoist all 81 weight/bias scalar reads out of the chunk loop (JAX will not
    # CSE SMEM loads / scalar splats inside the loop for you).
    w1 = [[p_ref[_W1 + j * 2 + k] for k in range(2)] for j in range(5)]
    b1 = [p_ref[_B1 + j] for j in range(5)]
    w2 = [[p_ref[_W2 + j * 5 + k] for k in range(5)] for j in range(5)]
    b2 = [p_ref[_B2 + j] for j in range(5)]
    w3 = [[p_ref[_W3 + j * 5 + k] for k in range(5)] for j in range(5)]
    b3 = [p_ref[_B3 + j] for j in range(5)]
    w4 = [[p_ref[_W4 + k] for k in range(5)]]
    b4 = [p_ref[_B4]]

    relu = lambda v: jnp.maximum(v, 0.0)
    # sigmoid(z) == 0.5 * tanh(z/2) + 0.5 : EUP tanh + one VALU fma, no divide.
    sigmoid = lambda v: 0.5 * jnp.tanh(0.5 * v) + 0.5

    def dense(acts, w, b, act_fn):
        # y_j = act( sum_k w[j][k] * x_k + b_j ) — scalar-broadcast VPU FMAs
        # on dense [8,128] activation chunks; no MXU involvement.
        outs = []
        for wj, bj in zip(w, b):
            acc = acts[0] * wj[0]
            for k in range(1, len(wj)):
                acc = acc + acts[k] * wj[k]
            outs.append(act_fn(acc + bj))
        return outs

    # Zero-cost static ref views of the two feature planes.
    x0_ref = x_ref.at[0]
    x1_ref = x_ref.at[1]
    n_chunks = o_ref.shape[0] // _CHUNK_ROWS

    def chunk(c, carry):
        s = pl.multiple_of(c * _CHUNK_ROWS, _CHUNK_ROWS)
        x = [x0_ref[pl.ds(s, _CHUNK_ROWS), :],          # [8,128] vreg each
             x1_ref[pl.ds(s, _CHUNK_ROWS), :]]
        h = dense(x, w1, b1, relu)                       # Linear(2,5) + ReLU
        h = dense(h, w2, b2, jnp.tanh)                   # Linear(5,5) + Tanh
        h = dense(h, w3, b3, relu)                       # Linear(5,5) + ReLU
        z = dense(h, w4, b4, sigmoid)                    # Linear(5,1) + Sigmoid
        o_ref[pl.ds(s, _CHUNK_ROWS), :] = z[0].astype(o_ref.dtype)
        return carry

    lax.fori_loop(0, n_chunks, chunk, 0, unroll=True)


def _pack_params(params):
    flat = []
    for (w, b) in params:
        flat.append(jnp.asarray(w, jnp.float32).reshape(-1))
        flat.append(jnp.asarray(b, jnp.float32).reshape(-1))
    p = jnp.concatenate(flat)
    assert p.shape == (_NPARAMS,)
    return p


def _choose_tile(n, tm_req):
    """Batch-tile size: multiple of 1024, capped for tiny batches, >=2 tiles
    when possible so the 'parallel' axis shards across v7x's two TCs."""
    tm = _ROW_ALIGN * max(1, tm_req // _ROW_ALIGN)
    min_pad = _ROW_ALIGN * pl.cdiv(n, _ROW_ALIGN)
    tm = min(tm, min_pad)                        # never over-pad tiny batches
    if min_pad >= 2 * _ROW_ALIGN and tm > min_pad // 2:
        tm = _ROW_ALIGN * pl.cdiv(min_pad // 2, _ROW_ALIGN)
    return tm


def circlemodel_forward(x, params, *, tm=32768):
    """x: [N, 2] float32 -> [N, 1] float32."""
    n = x.shape[0]
    tm = _choose_tile(n, tm)
    n_tiles = pl.cdiv(n, tm)
    n_pad = n_tiles * tm
    rows_tile = tm // _LANES          # multiple of 8 -> (8,128)-conforming
    rows_total = n_pad // _LANES

    # Feature-major, vreg-dense input [2, rows, 128], zero-padded to a tile
    # multiple (padding is computed but sliced off afterwards).
    x_pad = jnp.zeros((n_pad, 2), jnp.float32).at[:n].set(
        jnp.asarray(x, jnp.float32))
    x_t = x_pad.T.reshape(2, rows_total, _LANES)
    p = _pack_params(params)

    out = pl.pallas_call(
        mlp_kernel,
        out_shape=jax.ShapeDtypeStruct((rows_total, _LANES), jnp.float32),
        grid_spec=pltpu.PrefetchScalarGridSpec(
            num_scalar_prefetch=0,
            grid=(n_tiles,),
            in_specs=[
                # Packed scalar parameters, resident in SMEM (one tiny copy).
                pl.BlockSpec(memory_space=pltpu.MemorySpace.SMEM),
                # vreg-dense input tile [2, tm//128, 128].
                pl.BlockSpec((2, rows_tile, _LANES), lambda i: (0, i, 0)),
            ],
            out_specs=pl.BlockSpec((rows_tile, _LANES), lambda i: (i, 0)),
        ),
        compiler_params=pltpu.CompilerParams(
            dimension_semantics=("parallel",)),
    )(p, x_t)

    # Drop batch padding and restore the PyTorch [N, 1] layout.
    return out.reshape(-1)[:n].reshape(n, 1)


def init_params(key):
    """Deterministic init mimicking nn.Linear (uniform +-1/sqrt(fan_in))."""
    dims = [(2, 5), (5, 5), (5, 5), (5, 1)]
    params = []
    for (fan_in, fan_out) in dims:
        key, kw, kb = jax.random.split(key, 3)
        bound = 1.0 / jnp.sqrt(jnp.float32(fan_in))
        w = jax.random.uniform(kw, (fan_out, fan_in), jnp.float32, -bound, bound)
        b = jax.random.uniform(kb, (fan_out,), jnp.float32, -bound, bound)
        params.append((w, b))
    return params


def reference_forward(x, params):
    (w1, b1), (w2, b2), (w3, b3), (w4, b4) = params
    h = jnp.maximum(x @ w1.T + b1, 0.0)
    h = jnp.tanh(h @ w2.T + b2)
    h = jnp.maximum(h @ w3.T + b3, 0.0)
    return jax.nn.sigmoid(h @ w4.T + b4)


if __name__ == "__main__":
    key = jax.random.PRNGKey(0)
    key, kx = jax.random.split(key)
    params = init_params(key)

    # Small batch of 2-D points (the "circle" classification task).
    N = 16
    x = jax.random.normal(kx, (N, 2), jnp.float32)
    out = jax.block_until_ready(circlemodel_forward(x, params))
    ref = reference_forward(x, params)
    assert out.shape == (N, 1)
    assert jnp.allclose(out, ref, atol=1e-5, rtol=1e-5), "mismatch vs reference"

    # Padded-tail path (N not a multiple of the tile).
    N2 = 300
    key, kx2 = jax.random.split(key)
    x2 = jax.random.normal(kx2, (N2, 2), jnp.float32)
    out2 = jax.block_until_ready(circlemodel_forward(x2, params, tm=1024))
    ref2 = reference_forward(x2, params)
    assert out2.shape == (N2, 1)
    assert jnp.allclose(out2, ref2, atol=1e-5, rtol=1e-5), "tail mismatch"

    # Multi-tile grid + multi-chunk inner loop (2 tiles x 2 chunks, padded tail).
    N3 = 3000
    key, kx3 = jax.random.split(key)
    x3 = jax.random.normal(kx3, (N3, 2), jnp.float32)
    out3 = jax.block_until_ready(circlemodel_forward(x3, params))
    ref3 = reference_forward(x3, params)
    assert out3.shape == (N3, 1)
    assert jnp.allclose(out3, ref3, atol=1e-5, rtol=1e-5), "multi-tile mismatch"

    print("KERNEL_OK")
</pallas_src>

<mosaic_0001>
module attributes {stable_mosaic.version = 11 : i64} {
  func.func @mlp_kernel(%arg0: i32, %arg1: memref<81xf32, #tpu.memory_space<smem>>, %arg2: memref<2x8x128xf32, #tpu.memory_space<vmem>>, %arg3: memref<8x128xf32, #tpu.memory_space<vmem>>) attributes {dimension_semantics = [#tpu.dimension_semantics<parallel>], iteration_bounds = array<i64: 1>, scalar_prefetch = 0 : i64, scratch_operands = 0 : i64, tpu.core_type = #tpu.core_type<tc>, window_params = [{transform_indices = @transform_0, window_bounds = array<i64: 81>}, {transform_indices = @transform_1, window_bounds = array<i64: 2, 8, 128>}, {transform_indices = @transform_2, window_bounds = array<i64: 8, 128>}]} {
    %c0 = arith.constant 0 : index
    %0 = memref.load %arg1[%c0] : memref<81xf32, #tpu.memory_space<smem>>
    %c1 = arith.constant 1 : index
    %1 = memref.load %arg1[%c1] : memref<81xf32, #tpu.memory_space<smem>>
    %c2 = arith.constant 2 : index
    %2 = memref.load %arg1[%c2] : memref<81xf32, #tpu.memory_space<smem>>
    %c3 = arith.constant 3 : index
    %3 = memref.load %arg1[%c3] : memref<81xf32, #tpu.memory_space<smem>>
    %c4 = arith.constant 4 : index
    %4 = memref.load %arg1[%c4] : memref<81xf32, #tpu.memory_space<smem>>
    %c5 = arith.constant 5 : index
    %5 = memref.load %arg1[%c5] : memref<81xf32, #tpu.memory_space<smem>>
    %c6 = arith.constant 6 : index
    %6 = memref.load %arg1[%c6] : memref<81xf32, #tpu.memory_space<smem>>
    %c7 = arith.constant 7 : index
    %7 = memref.load %arg1[%c7] : memref<81xf32, #tpu.memory_space<smem>>
    %c8 = arith.constant 8 : index
    %8 = memref.load %arg1[%c8] : memref<81xf32, #tpu.memory_space<smem>>
    %c9 = arith.constant 9 : index
    %9 = memref.load %arg1[%c9] : memref<81xf32, #tpu.memory_space<smem>>
    %c10 = arith.constant 10 : index
    %10 = memref.load %arg1[%c10] : memref<81xf32, #tpu.memory_space<smem>>
    %c11 = arith.constant 11 : index
    %11 = memref.load %arg1[%c11] : memref<81xf32, #tpu.memory_space<smem>>
    %c12 = arith.constant 12 : index
    %12 = memref.load %arg1[%c12] : memref<81xf32, #tpu.memory_space<smem>>
    %c13 = arith.constant 13 : index
    %13 = memref.load %arg1[%c13] : memref<81xf32, #tpu.memory_space<smem>>
    %c14 = arith.constant 14 : index
    %14 = memref.load %arg1[%c14] : memref<81xf32, #tpu.memory_space<smem>>
    %c15 = arith.constant 15 : index
    %15 = memref.load %arg1[%c15] : memref<81xf32, #tpu.memory_space<smem>>
    %c16 = arith.constant 16 : index
    %16 = memref.load %arg1[%c16] : memref<81xf32, #tpu.memory_space<smem>>
    %c17 = arith.constant 17 : index
    %17 = memref.load %arg1[%c17] : memref<81xf32, #tpu.memory_space<smem>>
    %c18 = arith.constant 18 : index
    %18 = memref.load %arg1[%c18] : memref<81xf32, #tpu.memory_space<smem>>
    %c19 = arith.constant 19 : index
    %19 = memref.load %arg1[%c19] : memref<81xf32, #tpu.memory_space<smem>>
    %c20 = arith.constant 20 : index
    %20 = memref.load %arg1[%c20] : memref<81xf32, #tpu.memory_space<smem>>
    %c21 = arith.constant 21 : index
    %21 = memref.load %arg1[%c21] : memref<81xf32, #tpu.memory_space<smem>>
    %c22 = arith.constant 22 : index
    %22 = memref.load %arg1[%c22] : memref<81xf32, #tpu.memory_space<smem>>
    %c23 = arith.constant 23 : index
    %23 = memref.load %arg1[%c23] : memref<81xf32, #tpu.memory_space<smem>>
    %c24 = arith.constant 24 : index
    %24 = memref.load %arg1[%c24] : memref<81xf32, #tpu.memory_space<smem>>
    %c25 = arith.constant 25 : index
    %25 = memref.load %arg1[%c25] : memref<81xf32, #tpu.memory_space<smem>>
    %c26 = arith.constant 26 : index
    %26 = memref.load %arg1[%c26] : memref<81xf32, #tpu.memory_space<smem>>
    %c27 = arith.constant 27 : index
    %27 = memref.load %arg1[%c27] : memref<81xf32, #tpu.memory_space<smem>>
    %c28 = arith.constant 28 : index
    %28 = memref.load %arg1[%c28] : memref<81xf32, #tpu.memory_space<smem>>
    %c29 = arith.constant 29 : index
    %29 = memref.load %arg1[%c29] : memref<81xf32, #tpu.memory_space<smem>>
    %c30 = arith.constant 30 : index
    %30 = memref.load %arg1[%c30] : memref<81xf32, #tpu.memory_space<smem>>
    %c31 = arith.constant 31 : index
    %31 = memref.load %arg1[%c31] : memref<81xf32, #tpu.memory_space<smem>>
    %c32 = arith.constant 32 : index
    %32 = memref.load %arg1[%c32] : memref<81xf32, #tpu.memory_space<smem>>
    %c33 = arith.constant 33 : index
    %33 = memref.load %arg1[%c33] : memref<81xf32, #tpu.memory_space<smem>>
    %c34 = arith.constant 34 : index
    %34 = memref.load %arg1[%c34] : memref<81xf32, #tpu.memory_space<smem>>
    %c35 = arith.constant 35 : index
    %35 = memref.load %arg1[%c35] : memref<81xf32, #tpu.memory_space<smem>>
    %c36 = arith.constant 36 : index
    %36 = memref.load %arg1[%c36] : memref<81xf32, #tpu.memory_space<smem>>
    %c37 = arith.constant 37 : index
    %37 = memref.load %arg1[%c37] : memref<81xf32, #tpu.memory_space<smem>>
    %c38 = arith.constant 38 : index
    %38 = memref.load %arg1[%c38] : memref<81xf32, #tpu.memory_space<smem>>
    %c39 = arith.constant 39 : index
    %39 = memref.load %arg1[%c39] : memref<81xf32, #tpu.memory_space<smem>>
    %c40 = arith.constant 40 : index
    %40 = memref.load %arg1[%c40] : memref<81xf32, #tpu.memory_space<smem>>
    %c41 = arith.constant 41 : index
    %41 = memref.load %arg1[%c41] : memref<81xf32, #tpu.memory_space<smem>>
    %c42 = arith.constant 42 : index
    %42 = memref.load %arg1[%c42] : memref<81xf32, #tpu.memory_space<smem>>
    %c43 = arith.constant 43 : index
    %43 = memref.load %arg1[%c43] : memref<81xf32, #tpu.memory_space<smem>>
    %c44 = arith.constant 44 : index
    %44 = memref.load %arg1[%c44] : memref<81xf32, #tpu.memory_space<smem>>
    %c45 = arith.constant 45 : index
    %45 = memref.load %arg1[%c45] : memref<81xf32, #tpu.memory_space<smem>>
    %c46 = arith.constant 46 : index
    %46 = memref.load %arg1[%c46] : memref<81xf32, #tpu.memory_space<smem>>
    %c47 = arith.constant 47 : index
    %47 = memref.load %arg1[%c47] : memref<81xf32, #tpu.memory_space<smem>>
    %c48 = arith.constant 48 : index
    %48 = memref.load %arg1[%c48] : memref<81xf32, #tpu.memory_space<smem>>
    %c49 = arith.constant 49 : index
    %49 = memref.load %arg1[%c49] : memref<81xf32, #tpu.memory_space<smem>>
    %c50 = arith.constant 50 : index
    %50 = memref.load %arg1[%c50] : memref<81xf32, #tpu.memory_space<smem>>
    %c51 = arith.constant 51 : index
    %51 = memref.load %arg1[%c51] : memref<81xf32, #tpu.memory_space<smem>>
    %c52 = arith.constant 52 : index
    %52 = memref.load %arg1[%c52] : memref<81xf32, #tpu.memory_space<smem>>
    %c53 = arith.constant 53 : index
    %53 = memref.load %arg1[%c53] : memref<81xf32, #tpu.memory_space<smem>>
    %c54 = arith.constant 54 : index
    %54 = memref.load %arg1[%c54] : memref<81xf32, #tpu.memory_space<smem>>
    %c55 = arith.constant 55 : index
    %55 = memref.load %arg1[%c55] : memref<81xf32, #tpu.memory_space<smem>>
    %c56 = arith.constant 56 : index
    %56 = memref.load %arg1[%c56] : memref<81xf32, #tpu.memory_space<smem>>
    %c57 = arith.constant 57 : index
    %57 = memref.load %arg1[%c57] : memref<81xf32, #tpu.memory_space<smem>>
    %c58 = arith.constant 58 : index
    %58 = memref.load %arg1[%c58] : memref<81xf32, #tpu.memory_space<smem>>
    %c59 = arith.constant 59 : index
    %59 = memref.load %arg1[%c59] : memref<81xf32, #tpu.memory_space<smem>>
    %c60 = arith.constant 60 : index
    %60 = memref.load %arg1[%c60] : memref<81xf32, #tpu.memory_space<smem>>
    %c61 = arith.constant 61 : index
    %61 = memref.load %arg1[%c61] : memref<81xf32, #tpu.memory_space<smem>>
    %c62 = arith.constant 62 : index
    %62 = memref.load %arg1[%c62] : memref<81xf32, #tpu.memory_space<smem>>
    %c63 = arith.constant 63 : index
    %63 = memref.load %arg1[%c63] : memref<81xf32, #tpu.memory_space<smem>>
    %c64 = arith.constant 64 : index
    %64 = memref.load %arg1[%c64] : memref<81xf32, #tpu.memory_space<smem>>
    %c65 = arith.constant 65 : index
    %65 = memref.load %arg1[%c65] : memref<81xf32, #tpu.memory_space<smem>>
    %c66 = arith.constant 66 : index
    %66 = memref.load %arg1[%c66] : memref<81xf32, #tpu.memory_space<smem>>
    %c67 = arith.constant 67 : index
    %67 = memref.load %arg1[%c67] : memref<81xf32, #tpu.memory_space<smem>>
    %c68 = arith.constant 68 : index
    %68 = memref.load %arg1[%c68] : memref<81xf32, #tpu.memory_space<smem>>
    %c69 = arith.constant 69 : index
    %69 = memref.load %arg1[%c69] : memref<81xf32, #tpu.memory_space<smem>>
    %c70 = arith.constant 70 : index
    %70 = memref.load %arg1[%c70] : memref<81xf32, #tpu.memory_space<smem>>
    %c71 = arith.constant 71 : index
    %71 = memref.load %arg1[%c71] : memref<81xf32, #tpu.memory_space<smem>>
    %c72 = arith.constant 72 : index
    %72 = memref.load %arg1[%c72] : memref<81xf32, #tpu.memory_space<smem>>
    %c73 = arith.constant 73 : index
    %73 = memref.load %arg1[%c73] : memref<81xf32, #tpu.memory_space<smem>>
    %c74 = arith.constant 74 : index
    %74 = memref.load %arg1[%c74] : memref<81xf32, #tpu.memory_space<smem>>
    %c75 = arith.constant 75 : index
    %75 = memref.load %arg1[%c75] : memref<81xf32, #tpu.memory_space<smem>>
    %c76 = arith.constant 76 : index
    %76 = memref.load %arg1[%c76] : memref<81xf32, #tpu.memory_space<smem>>
    %c77 = arith.constant 77 : index
    %77 = memref.load %arg1[%c77] : memref<81xf32, #tpu.memory_space<smem>>
    %c78 = arith.constant 78 : index
    %78 = memref.load %arg1[%c78] : memref<81xf32, #tpu.memory_space<smem>>
    %c79 = arith.constant 79 : index
    %79 = memref.load %arg1[%c79] : memref<81xf32, #tpu.memory_space<smem>>
    %c80 = arith.constant 80 : index
    %80 = memref.load %arg1[%c80] : memref<81xf32, #tpu.memory_space<smem>>
    %c0_i32 = arith.constant 0 : i32
    %c1_i32 = arith.constant 1 : i32
    %c0_i32_0 = arith.constant 0 : i32
    %c8_i32 = arith.constant 8 : i32
    %81 = arith.muli %c0_i32_0, %c8_i32 : i32
    %82 = tpu.assume_multiple %81, 8 : i32
    %c0_i32_1 = arith.constant 0 : i32
    %c0_i32_2 = arith.constant 0 : i32
    %83 = tpu.memref_slice %arg2[%c0_i32, %c0_i32_1, %c0_i32_2] : memref<2x8x128xf32, #tpu.memory_space<vmem>> -> memref<1x8x128xf32, #tpu.memory_space<vmem>>
    %84 = tpu.memref_squeeze %83 : memref<1x8x128xf32, #tpu.memory_space<vmem>> -> memref<8x128xf32, #tpu.memory_space<vmem>>
    %85 = arith.index_cast %82 : i32 to index
    %c0_3 = arith.constant 0 : index
    %86 = vector.load %84[%85, %c0_3] : memref<8x128xf32, #tpu.memory_space<vmem>>, vector<8x128xf32>
    %c0_i32_4 = arith.constant 0 : i32
    %c0_i32_5 = arith.constant 0 : i32
    %87 = tpu.memref_slice %arg2[%c1_i32, %c0_i32_4, %c0_i32_5] : memref<2x8x128xf32, #tpu.memory_space<vmem>> -> memref<1x8x128xf32, #tpu.memory_space<vmem>>
    %88 = tpu.memref_squeeze %87 : memref<1x8x128xf32, #tpu.memory_space<vmem>> -> memref<8x128xf32, #tpu.memory_space<vmem>>
    %89 = arith.index_cast %82 : i32 to index
    %c0_6 = arith.constant 0 : index
    %90 = vector.load %88[%89, %c0_6] : memref<8x128xf32, #tpu.memory_space<vmem>>, vector<8x128xf32>
    %91 = vector.broadcast %0 : f32 to vector<8x128xf32>
    %92 = arith.mulf %86, %91 : vector<8x128xf32>
    %93 = vector.broadcast %1 : f32 to vector<8x128xf32>
    %94 = arith.mulf %90, %93 : vector<8x128xf32>
    %95 = arith.addf %92, %94 : vector<8x128xf32>
    %96 = vector.broadcast %10 : f32 to vector<8x128xf32>
    %97 = arith.addf %95, %96 : vector<8x128xf32>
    %cst = arith.constant 0.000000e+00 : f32
    %98 = vector.broadcast %cst : f32 to vector<8x128xf32>
    %99 = arith.maximumf %97, %98 : vector<8x128xf32>
    %100 = vector.broadcast %2 : f32 to vector<8x128xf32>
    %101 = arith.mulf %86, %100 : vector<8x128xf32>
    %102 = vector.broadcast %3 : f32 to vector<8x128xf32>
    %103 = arith.mulf %90, %102 : vector<8x128xf32>
    %104 = arith.addf %101, %103 : vector<8x128xf32>
    %105 = vector.broadcast %11 : f32 to vector<8x128xf32>
    %106 = arith.addf %104, %105 : vector<8x128xf32>
    %cst_7 = arith.constant 0.000000e+00 : f32
    %107 = vector.broadcast %cst_7 : f32 to vector<8x128xf32>
    %108 = arith.maximumf %106, %107 : vector<8x128xf32>
    %109 = vector.broadcast %4 : f32 to vector<8x128xf32>
    %110 = arith.mulf %86, %109 : vector<8x128xf32>
    %111 = vector.broadcast %5 : f32 to vector<8x128xf32>
    %112 = arith.mulf %90, %111 : vector<8x128xf32>
    %113 = arith.addf %110, %112 : vector<8x128xf32>
    %114 = vector.broadcast %12 : f32 to vector<8x128xf32>
    %115 = arith.addf %113, %114 : vector<8x128xf32>
    %cst_8 = arith.constant 0.000000e+00 : f32
    %116 = vector.broadcast %cst_8 : f32 to vector<8x128xf32>
    %117 = arith.maximumf %115, %116 : vector<8x128xf32>
    %118 = vector.broadcast %6 : f32 to vector<8x128xf32>
    %119 = arith.mulf %86, %118 : vector<8x128xf32>
    %120 = vector.broadcast %7 : f32 to vector<8x128xf32>
    %121 = arith.mulf %90, %120 : vector<8x128xf32>
    %122 = arith.addf %119, %121 : vector<8x128xf32>
    %123 = vector.broadcast %13 : f32 to vector<8x128xf32>
    %124 = arith.addf %122, %123 : vector<8x128xf32>
    %cst_9 = arith.constant 0.000000e+00 : f32
    %125 = vector.broadcast %cst_9 : f32 to vector<8x128xf32>
    %126 = arith.maximumf %124, %125 : vector<8x128xf32>
    %127 = vector.broadcast %8 : f32 to vector<8x128xf32>
    %128 = arith.mulf %86, %127 : vector<8x128xf32>
    %129 = vector.broadcast %9 : f32 to vector<8x128xf32>
    %130 = arith.mulf %90, %129 : vector<8x128xf32>
    %131 = arith.addf %128, %130 : vector<8x128xf32>
    %132 = vector.broadcast %14 : f32 to vector<8x128xf32>
    %133 = arith.addf %131, %132 : vector<8x128xf32>
    %cst_10 = arith.constant 0.000000e+00 : f32
    %134 = vector.broadcast %cst_10 : f32 to vector<8x128xf32>
    %135 = arith.maximumf %133, %134 : vector<8x128xf32>
    %136 = vector.broadcast %15 : f32 to vector<8x128xf32>
    %137 = arith.mulf %99, %136 : vector<8x128xf32>
    %138 = vector.broadcast %16 : f32 to vector<8x128xf32>
    %139 = arith.mulf %108, %138 : vector<8x128xf32>
    %140 = arith.addf %137, %139 : vector<8x128xf32>
    %141 = vector.broadcast %17 : f32 to vector<8x128xf32>
    %142 = arith.mulf %117, %141 : vector<8x128xf32>
    %143 = arith.addf %140, %142 : vector<8x128xf32>
    %144 = vector.broadcast %18 : f32 to vector<8x128xf32>
    %145 = arith.mulf %126, %144 : vector<8x128xf32>
    %146 = arith.addf %143, %145 : vector<8x128xf32>
    %147 = vector.broadcast %19 : f32 to vector<8x128xf32>
    %148 = arith.mulf %135, %147 : vector<8x128xf32>
    %149 = arith.addf %146, %148 : vector<8x128xf32>
    %150 = vector.broadcast %40 : f32 to vector<8x128xf32>
    %151 = arith.addf %149, %150 : vector<8x128xf32>
    %152 = math.tanh %151 : vector<8x128xf32>
    %153 = vector.broadcast %20 : f32 to vector<8x128xf32>
    %154 = arith.mulf %99, %153 : vector<8x128xf32>
    %155 = vector.broadcast %21 : f32 to vector<8x128xf32>
    %156 = arith.mulf %108, %155 : vector<8x128xf32>
    %157 = arith.addf %154, %156 : vector<8x128xf32>
    %158 = vector.broadcast %22 : f32 to vector<8x128xf32>
    %159 = arith.mulf %117, %158 : vector<8x128xf32>
    %160 = arith.addf %157, %159 : vector<8x128xf32>
    %161 = vector.broadcast %23 : f32 to vector<8x128xf32>
    %162 = arith.mulf %126, %161 : vector<8x128xf32>
    %163 = arith.addf %160, %162 : vector<8x128xf32>
    %164 = vector.broadcast %24 : f32 to vector<8x128xf32>
    %165 = arith.mulf %135, %164 : vector<8x128xf32>
    %166 = arith.addf %163, %165 : vector<8x128xf32>
    %167 = vector.broadcast %41 : f32 to vector<8x128xf32>
    %168 = arith.addf %166, %167 : vector<8x128xf32>
    %169 = math.tanh %168 : vector<8x128xf32>
    %170 = vector.broadcast %25 : f32 to vector<8x128xf32>
    %171 = arith.mulf %99, %170 : vector<8x128xf32>
    %172 = vector.broadcast %26 : f32 to vector<8x128xf32>
    %173 = arith.mulf %108, %172 : vector<8x128xf32>
    %174 = arith.addf %171, %173 : vector<8x128xf32>
    %175 = vector.broadcast %27 : f32 to vector<8x128xf32>
    %176 = arith.mulf %117, %175 : vector<8x128xf32>
    %177 = arith.addf %174, %176 : vector<8x128xf32>
    %178 = vector.broadcast %28 : f32 to vector<8x128xf32>
    %179 = arith.mulf %126, %178 : vector<8x128xf32>
    %180 = arith.addf %177, %179 : vector<8x128xf32>
    %181 = vector.broadcast %29 : f32 to vector<8x128xf32>
    %182 = arith.mulf %135, %181 : vector<8x128xf32>
    %183 = arith.addf %180, %182 : vector<8x128xf32>
    %184 = vector.broadcast %42 : f32 to vector<8x128xf32>
    %185 = arith.addf %183, %184 : vector<8x128xf32>
    %186 = math.tanh %185 : vector<8x128xf32>
    %187 = vector.broadcast %30 : f32 to vector<8x128xf32>
    %188 = arith.mulf %99, %187 : vector<8x128xf32>
    %189 = vector.broadcast %31 : f32 to vector<8x128xf32>
    %190 = arith.mulf %108, %189 : vector<8x128xf32>
    %191 = arith.addf %188, %190 : vector<8x128xf32>
    %192 = vector.broadcast %32 : f32 to vector<8x128xf32>
    %193 = arith.mulf %117, %192 : vector<8x128xf32>
    %194 = arith.addf %191, %193 : vector<8x128xf32>
    %195 = vector.broadcast %33 : f32 to vector<8x128xf32>
    %196 = arith.mulf %126, %195 : vector<8x128xf32>
    %197 = arith.addf %194, %196 : vector<8x128xf32>
    %198 = vector.broadcast %34 : f32 to vector<8x128xf32>
    %199 = arith.mulf %135, %198 : vector<8x128xf32>
    %200 = arith.addf %197, %199 : vector<8x128xf32>
    %201 = vector.broadcast %43 : f32 to vector<8x128xf32>
    %202 = arith.addf %200, %201 : vector<8x128xf32>
    %203 = math.tanh %202 : vector<8x128xf32>
    %204 = vector.broadcast %35 : f32 to vector<8x128xf32>
    %205 = arith.mulf %99, %204 : vector<8x128xf32>
    %206 = vector.broadcast %36 : f32 to vector<8x128xf32>
    %207 = arith.mulf %108, %206 : vector<8x128xf32>
    %208 = arith.addf %205, %207 : vector<8x128xf32>
    %209 = vector.broadcast %37 : f32 to vector<8x128xf32>
    %210 = arith.mulf %117, %209 : vector<8x128xf32>
    %211 = arith.addf %208, %210 : vector<8x128xf32>
    %212 = vector.broadcast %38 : f32 to vector<8x128xf32>
    %213 = arith.mulf %126, %212 : vector<8x128xf32>
    %214 = arith.addf %211, %213 : vector<8x128xf32>
    %215 = vector.broadcast %39 : f32 to vector<8x128xf32>
    %216 = arith.mulf %135, %215 : vector<8x128xf32>
    %217 = arith.addf %214, %216 : vector<8x128xf32>
    %218 = vector.broadcast %44 : f32 to vector<8x128xf32>
    %219 = arith.addf %217, %218 : vector<8x128xf32>
    %220 = math.tanh %219 : vector<8x128xf32>
    %221 = vector.broadcast %45 : f32 to vector<8x128xf32>
    %222 = arith.mulf %152, %221 : vector<8x128xf32>
    %223 = vector.broadcast %46 : f32 to vector<8x128xf32>
    %224 = arith.mulf %169, %223 : vector<8x128xf32>
    %225 = arith.addf %222, %224 : vector<8x128xf32>
    %226 = vector.broadcast %47 : f32 to vector<8x128xf32>
    %227 = arith.mulf %186, %226 : vector<8x128xf32>
    %228 = arith.addf %225, %227 : vector<8x128xf32>
    %229 = vector.broadcast %48 : f32 to vector<8x128xf32>
    %230 = arith.mulf %203, %229 : vector<8x128xf32>
    %231 = arith.addf %228, %230 : vector<8x128xf32>
    %232 = vector.broadcast %49 : f32 to vector<8x128xf32>
    %233 = arith.mulf %220, %232 : vector<8x128xf32>
    %234 = arith.addf %231, %233 : vector<8x128xf32>
    %235 = vector.broadcast %70 : f32 to vector<8x128xf32>
    %236 = arith.addf %234, %235 : vector<8x128xf32>
    %cst_11 = arith.constant 0.000000e+00 : f32
    %237 = vector.broadcast %cst_11 : f32 to vector<8x128xf32>
    %238 = arith.maximumf %236, %237 : vector<8x128xf32>
    %239 = vector.broadcast %50 : f32 to vector<8x128xf32>
    %240 = arith.mulf %152, %239 : vector<8x128xf32>
    %241 = vector.broadcast %51 : f32 to vector<8x128xf32>
    %242 = arith.mulf %169, %241 : vector<8x128xf32>
    %243 = arith.addf %240, %242 : vector<8x128xf32>
    %244 = vector.broadcast %52 : f32 to vector<8x128xf32>
    %245 = arith.mulf %186, %244 : vector<8x128xf32>
    %246 = arith.addf %243, %245 : vector<8x128xf32>
    %247 = vector.broadcast %53 : f32 to vector<8x128xf32>
    %248 = arith.mulf %203, %247 : vector<8x128xf32>
    %249 = arith.addf %246, %248 : vector<8x128xf32>
    %250 = vector.broadcast %54 : f32 to vector<8x128xf32>
    %251 = arith.mulf %220, %250 : vector<8x128xf32>
    %252 = arith.addf %249, %251 : vector<8x128xf32>
    %253 = vector.broadcast %71 : f32 to vector<8x128xf32>
    %254 = arith.addf %252, %253 : vector<8x128xf32>
    %cst_12 = arith.constant 0.000000e+00 : f32
    %255 = vector.broadcast %cst_12 : f32 to vector<8x128xf32>
    %256 = arith.maximumf %254, %255 : vector<8x128xf32>
    %257 = vector.broadcast %55 : f32 to vector<8x128xf32>
    %258 = arith.mulf %152, %257 : vector<8x128xf32>
    %259 = vector.broadcast %56 : f32 to vector<8x128xf32>
    %260 = arith.mulf %169, %259 : vector<8x128xf32>
    %261 = arith.addf %258, %260 : vector<8x128xf32>
    %262 = vector.broadcast %57 : f32 to vector<8x128xf32>
    %263 = arith.mulf %186, %262 : vector<8x128xf32>
    %264 = arith.addf %261, %263 : vector<8x128xf32>
    %265 = vector.broadcast %58 : f32 to vector<8x128xf32>
    %266 = arith.mulf %203, %265 : vector<8x128xf32>
    %267 = arith.addf %264, %266 : vector<8x128xf32>
    %268 = vector.broadcast %59 : f32 to vector<8x128xf32>
    %269 = arith.mulf %220, %268 : vector<8x128xf32>
    %270 = arith.addf %267, %269 : vector<8x128xf32>
    %271 = vector.broadcast %72 : f32 to vector<8x128xf32>
    %272 = arith.addf %270, %271 : vector<8x128xf32>
    %cst_13 = arith.constant 0.000000e+00 : f32
    %273 = vector.broadcast %cst_13 : f32 to vector<8x128xf32>
    %274 = arith.maximumf %272, %273 : vector<8x128xf32>
    %275 = vector.broadcast %60 : f32 to vector<8x128xf32>
    %276 = arith.mulf %152, %275 : vector<8x128xf32>
    %277 = vector.broadcast %61 : f32 to vector<8x128xf32>
    %278 = arith.mulf %169, %277 : vector<8x128xf32>
    %279 = arith.addf %276, %278 : vector<8x128xf32>
    %280 = vector.broadcast %62 : f32 to vector<8x128xf32>
    %281 = arith.mulf %186, %280 : vector<8x128xf32>
    %282 = arith.addf %279, %281 : vector<8x128xf32>
    %283 = vector.broadcast %63 : f32 to vector<8x128xf32>
    %284 = arith.mulf %203, %283 : vector<8x128xf32>
    %285 = arith.addf %282, %284 : vector<8x128xf32>
    %286 = vector.broadcast %64 : f32 to vector<8x128xf32>
    %287 = arith.mulf %220, %286 : vector<8x128xf32>
    %288 = arith.addf %285, %287 : vector<8x128xf32>
    %289 = vector.broadcast %73 : f32 to vector<8x128xf32>
    %290 = arith.addf %288, %289 : vector<8x128xf32>
    %cst_14 = arith.constant 0.000000e+00 : f32
    %291 = vector.broadcast %cst_14 : f32 to vector<8x128xf32>
    %292 = arith.maximumf %290, %291 : vector<8x128xf32>
    %293 = vector.broadcast %65 : f32 to vector<8x128xf32>
    %294 = arith.mulf %152, %293 : vector<8x128xf32>
    %295 = vector.broadcast %66 : f32 to vector<8x128xf32>
    %296 = arith.mulf %169, %295 : vector<8x128xf32>
    %297 = arith.addf %294, %296 : vector<8x128xf32>
    %298 = vector.broadcast %67 : f32 to vector<8x128xf32>
    %299 = arith.mulf %186, %298 : vector<8x128xf32>
    %300 = arith.addf %297, %299 : vector<8x128xf32>
    %301 = vector.broadcast %68 : f32 to vector<8x128xf32>
    %302 = arith.mulf %203, %301 : vector<8x128xf32>
    %303 = arith.addf %300, %302 : vector<8x128xf32>
    %304 = vector.broadcast %69 : f32 to vector<8x128xf32>
    %305 = arith.mulf %220, %304 : vector<8x128xf32>
    %306 = arith.addf %303, %305 : vector<8x128xf32>
    %307 = vector.broadcast %74 : f32 to vector<8x128xf32>
    %308 = arith.addf %306, %307 : vector<8x128xf32>
    %cst_15 = arith.constant 0.000000e+00 : f32
    %309 = vector.broadcast %cst_15 : f32 to vector<8x128xf32>
    %310 = arith.maximumf %308, %309 : vector<8x128xf32>
    %311 = vector.broadcast %75 : f32 to vector<8x128xf32>
    %312 = arith.mulf %238, %311 : vector<8x128xf32>
    %313 = vector.broadcast %76 : f32 to vector<8x128xf32>
    %314 = arith.mulf %256, %313 : vector<8x128xf32>
    %315 = arith.addf %312, %314 : vector<8x128xf32>
    %316 = vector.broadcast %77 : f32 to vector<8x128xf32>
    %317 = arith.mulf %274, %316 : vector<8x128xf32>
    %318 = arith.addf %315, %317 : vector<8x128xf32>
    %319 = vector.broadcast %78 : f32 to vector<8x128xf32>
    %320 = arith.mulf %292, %319 : vector<8x128xf32>
    %321 = arith.addf %318, %320 : vector<8x128xf32>
    %322 = vector.broadcast %79 : f32 to vector<8x128xf32>
    %323 = arith.mulf %310, %322 : vector<8x128xf32>
    %324 = arith.addf %321, %323 : vector<8x128xf32>
    %325 = vector.broadcast %80 : f32 to vector<8x128xf32>
    %326 = arith.addf %324, %325 : vector<8x128xf32>
    %cst_16 = arith.constant 5.000000e-01 : f32
    %327 = vector.broadcast %cst_16 : f32 to vector<8x128xf32>
    %328 = arith.mulf %327, %326 : vector<8x128xf32>
    %329 = math.tanh %328 : vector<8x128xf32>
    %cst_17 = arith.constant 5.000000e-01 : f32
    %330 = vector.broadcast %cst_17 : f32 to vector<8x128xf32>
    %331 = arith.mulf %330, %329 : vector<8x128xf32>
    %cst_18 = arith.constant 5.000000e-01 : f32
    %332 = vector.broadcast %cst_18 : f32 to vector<8x128xf32>
    %333 = arith.addf %331, %332 : vector<8x128xf32>
    %334 = arith.index_cast %82 : i32 to index
    %c0_19 = arith.constant 0 : index
    %335 = vector.load %arg3[%334, %c0_19] : memref<8x128xf32, #tpu.memory_space<vmem>>, vector<8x128xf32>
    tpu.vector_store %arg3[%334, %c0_19], %333 {strides = array<i32>} : memref<8x128xf32, #tpu.memory_space<vmem>>, vector<8x128xf32>,
    %c1_i32_20 = arith.constant 1 : i32
    return
  }
  func.func @transform_0(%arg0: i32) -> i32 {
    %c0_i32 = arith.constant 0 : i32
    %c0_i32_0 = arith.constant 0 : i32
    return %c0_i32 : i32
  }
  func.func @transform_1(%arg0: i32) -> (i32, i32, i32) {
    %c0_i32 = arith.constant 0 : i32
    %c0_i32_0 = arith.constant 0 : i32
    %c0_i32_1 = arith.constant 0 : i32
    return %c0_i32, %arg0, %c0_i32_0 : i32, i32, i32
  }
  func.func @transform_2(%arg0: i32) -> (i32, i32) {
    %c0_i32 = arith.constant 0 : i32
    %c0_i32_0 = arith.constant 0 : i32
    return %arg0, %c0_i32 : i32, i32
  }
}

</mosaic_0001>

<llo_original>
// kernel: tpu_custom_call.1
$region0: #{tpu_custom_call.1}
  #allocation0 [shape = 'u32[]', space=smem, size = 0x4, offset = 0x4, fixed_abs, tag = 'smem constant byte address 0x4 - core index']
  #allocation1 [shape = 'u32[144,128]{1,0:T(1,128)}', space=vmem, size = 0x12000, scoped, tag = 'internal scratch']
  %s0 = inlined_call_operand.hbm [shape: f32[81], index: 0, kind: input, shape index: {}]
  %s1 = inlined_call_operand.hbm [shape: f32[2,8,128], index: 1, kind: input, shape index: {}]
  %s2 = inlined_call_operand.hbm [shape: f32[8,128], index: 2, kind: output, shape index: {}]
  %s3 = sld [smem:[#allocation0]]
  $region26: #{tpu_custom_call.1} parent=0
    _
  %s5 = ssub.s32 1, %s3
  %s6 = scalar_select 0, %s5, %s3
  $region1: #{tpu_custom_call.1} parent=0
    #allocation2 [shape = 'u8[512]{0}', space=smem, size = 0x200, scoped, tag = 'input window, operand 0, single buffered']
    #allocation3 [shape = 's32[1]{0}', space=sflag, size = 0x4, scoped, tag = 'scoped memory for tpu_custom_call.1']
    #allocation4 [shape = 's32[1]{0}', space=sflag, size = 0x4, scoped, tag = 'scoped memory for tpu_custom_call.1']
    #allocation5 [shape = 's32[1]{0}', space=sflag, size = 0x4, scoped, tag = 'scoped memory for tpu_custom_call.1']
    #allocation6 [shape = 'u8[8192]{0}', space=vmem, size = 0x2000, scoped, tag = 'input window, operand 1, single buffered']
    #allocation7 [shape = 'u8[4096]{0}', space=vmem, size = 0x1000, scoped, tag = 'output window, operand 0, single buffered']
    %7 = vsyncpa [#allocation5], 0
    %8 = vsyncpa [#allocation3], 0
    %9 = vsyncpa [#allocation4], 0
    // Predicated region
    $region2: #{tpu_custom_call.1} parent=1 // pred_check
      _
    $region3: #{tpu_custom_call.1} parent=1 // pred_check_branch
      %11 = sbr.rel (0) target = $region5
    $region4: #{tpu_custom_call.1} parent=1 // pred_region
      %s13 = ssub.s32 16, 16
      %14 = vsyncadd [#allocation5], %s13
      %17 = dma.hbm_to_smem %s0, 16, [#allocation2], [#allocation5]
    $region5: #{tpu_custom_call.1} parent=1 // pred_fallthru
      _
    // Predicated region
    $region6: #{tpu_custom_call.1} parent=1 // pred_check
      _
    $region7: #{tpu_custom_call.1} parent=1 // pred_check_branch
      %19 = sbr.rel (0) target = $region9
    $region8: #{tpu_custom_call.1} parent=1 // pred_region
      %s21 = ssub.s32 256, 256
      %22 = vsyncadd [#allocation3], %s21
      %s23 = sshll.u32 [#allocation6], 4
      %s24 = int_to_ptr.vmem [resolvable:$true] %s23
      %29 = dma.hbm_to_vmem [thread:$0]  %s1, 256, %s24, [#allocation3], 128, 128, 8
    $region9: #{tpu_custom_call.1} parent=1 // pred_fallthru
      _
    // Predicated region
    $region10: #{tpu_custom_call.1} parent=1 // pred_check
      _
    $region11: #{tpu_custom_call.1} parent=1 // pred_check_branch
      %31 = sbr.rel (0) target = $region13
    $region12: #{tpu_custom_call.1} parent=1 // pred_region
      %32 = dma.done [#allocation5], 16
    $region13: #{tpu_custom_call.1} parent=1 // pred_fallthru
      _
    // Predicated region
    $region14: #{tpu_custom_call.1} parent=1 // pred_check
      _
    $region15: #{tpu_custom_call.1} parent=1 // pred_check_branch
      %34 = sbr.rel (0) target = $region17
    $region16: #{tpu_custom_call.1} parent=1 // pred_region
      %35 = dma.done [#allocation3], 256
    $region17: #{tpu_custom_call.1} parent=1 // pred_fallthru
      _
    %36 = sfence
    %s37 = sld [smem:[#allocation2]]
    %s38 = sld [smem:[#allocation2 + $0x1]]
    %s39 = sld [smem:[#allocation2 + $0x2]]
    %s40 = sld [smem:[#allocation2 + $0x3]]
    %s41 = sld [smem:[#allocation2 + $0x4]]
    %s42 = sld [smem:[#allocation2 + $0x5]]
    %s43 = sld [smem:[#allocation2 + $0x6]]
    %s44 = sld [smem:[#allocation2 + $0x7]]
    %s45 = sld [smem:[#allocation2 + $0x8]]
    %s46 = sld [smem:[#allocation2 + $0x9]]
    %s47 = sld [smem:[#allocation2 + $0xa]]
    %s48 = sld [smem:[#allocation2 + $0xb]]
    %s49 = sld [smem:[#allocation2 + $0xc]]
    %s50 = sld [smem:[#allocation2 + $0xd]]
    %s51 = sld [smem:[#allocation2 + $0xe]]
    %s52 = sld [smem:[#allocation2 + $0xf]]
    %s53 = sld [smem:[#allocation2 + $0x10]]
    %s54 = sld [smem:[#allocation2 + $0x11]]
    %s55 = sld [smem:[#allocation2 + $0x12]]
    %s56 = sld [smem:[#allocation2 + $0x13]]
    %s57 = sld [smem:[#allocation2 + $0x14]]
    %s58 = sld [smem:[#allocation2 + $0x15]]
    %s59 = sld [smem:[#allocation2 + $0x16]]
    %s60 = sld [smem:[#allocation2 + $0x17]]
    %s61 = sld [smem:[#allocation2 + $0x18]]
    %s62 = sld [smem:[#allocation2 + $0x19]]
    %s63 = sld [smem:[#allocation2 + $0x1a]]
    %s64 = sld [smem:[#allocation2 + $0x1b]]
    %s65 = sld [smem:[#allocation2 + $0x1c]]
    %s66 = sld [smem:[#allocation2 + $0x1d]]
    %s67 = sld [smem:[#allocation2 + $0x1e]]
    %s68 = sld [smem:[#allocation2 + $0x1f]]
    %s69 = sld [smem:[#allocation2 + $0x20]]
    %s70 = sld [smem:[#allocation2 + $0x21]]
    %s71 = sld [smem:[#allocation2 + $0x22]]
    %s72 = sld [smem:[#allocation2 + $0x23]]
    %s73 = sld [smem:[#allocation2 + $0x24]]
    %s74 = sld [smem:[#allocation2 + $0x25]]
    %s75 = sld [smem:[#allocation2 + $0x26]]
    %s76 = sld [smem:[#allocation2 + $0x27]]
    %s77 = sld [smem:[#allocation2 + $0x28]]
    %s78 = sld [smem:[#allocation2 + $0x29]]
    %s79 = sld [smem:[#allocation2 + $0x2a]]
    %s80 = sld [smem:[#allocation2 + $0x2b]]
    %s81 = sld [smem:[#allocation2 + $0x2c]]
    %s82 = sld [smem:[#allocation2 + $0x2d]]
    %s83 = sld [smem:[#allocation2 + $0x2e]]
    %s84 = sld [smem:[#allocation2 + $0x2f]]
    %s85 = sld [smem:[#allocation2 + $0x30]]
    %s86 = sld [smem:[#allocation2 + $0x31]]
    %s87 = sld [smem:[#allocation2 + $0x32]]
    %s88 = sld [smem:[#allocation2 + $0x33]]
    %s89 = sld [smem:[#allocation2 + $0x34]]
    %s90 = sld [smem:[#allocation2 + $0x35]]
    %s91 = sld [smem:[#allocation2 + $0x36]]
    %s92 = sld [smem:[#allocation2 + $0x37]]
    %s93 = sld [smem:[#allocation2 + $0x38]]
    %s94 = sld [smem:[#allocation2 + $0x39]]
    %s95 = sld [smem:[#allocation2 + $0x3a]]
    %s96 = sld [smem:[#allocation2 + $0x3b]]
    %s97 = sld [smem:[#allocation2 + $0x3c]]
    %s98 = sld [smem:[#allocation2 + $0x3d]]
    %s99 = sld [smem:[#allocation2 + $0x3e]]
    %s100 = sld [smem:[#allocation2 + $0x3f]]
    %s101 = sld [smem:[#allocation2 + $0x40]]
    %s102 = sld [smem:[#allocation2 + $0x41]]
    %s103 = sld [smem:[#allocation2 + $0x42]]
    %s104 = sld [smem:[#allocation2 + $0x43]]
    %s105 = sld [smem:[#allocation2 + $0x44]]
    %s106 = sld [smem:[#allocation2 + $0x45]]
    %s107 = sld [smem:[#allocation2 + $0x46]]
    %s108 = sld [smem:[#allocation2 + $0x47]]
    %s109 = sld [smem:[#allocation2 + $0x48]]
    %s110 = sld [smem:[#allocation2 + $0x49]]
    %s111 = sld [smem:[#allocation2 + $0x4a]]
    %s112 = sld [smem:[#allocation2 + $0x4b]]
    %s113 = sld [smem:[#allocation2 + $0x4c]]
    %s114 = sld [smem:[#allocation2 + $0x4d]]
    %s115 = sld [smem:[#allocation2 + $0x4e]]
    %s116 = sld [smem:[#allocation2 + $0x4f]]
    %s117 = sld [smem:[#allocation2 + $0x50]]
    %v118 = vld [vmem:[#allocation6] sm:$0xff]
    %s119 = scalar_lea.vmem [#allocation6], 8
    %v120 = vld [vmem:[%s119] sm:$0xff]
    %v121 = vstv %s37
    %v122 = vmul.f32 %v118, %v121
    %v123 = vstv %s38
    %v124 = vmul.f32 %v120, %v123
    %v125 = vadd.f32 %v122, %v124
    %v126 = vstv %s47
    %v127 = vadd.f32 %v125, %v126
    %v128 = vmax.f32 %v127, 0.0
    %v129 = vstv %s39
    %v130 = vmul.f32 %v118, %v129
    %v131 = vstv %s40
    %v132 = vmul.f32 %v120, %v131
    %v133 = vadd.f32 %v130, %v132
    %v134 = vstv %s48
    %v135 = vadd.f32 %v133, %v134
    %v136 = vmax.f32 %v135, 0.0
    %v137 = vstv %s41
    %v138 = vmul.f32 %v118, %v137
    %v139 = vstv %s42
    %v140 = vmul.f32 %v120, %v139
    %v141 = vadd.f32 %v138, %v140
    %v142 = vstv %s49
    %v143 = vadd.f32 %v141, %v142
    %v144 = vmax.f32 %v143, 0.0
    %v145 = vstv %s43
    %v146 = vmul.f32 %v118, %v145
    %v147 = vstv %s44
    %v148 = vmul.f32 %v120, %v147
    %v149 = vadd.f32 %v146, %v148
    %v150 = vstv %s50
    %v151 = vadd.f32 %v149, %v150
    %v152 = vmax.f32 %v151, 0.0
    %v153 = vstv %s45
    %v154 = vmul.f32 %v118, %v153
    %v155 = vstv %s46
    %v156 = vmul.f32 %v120, %v155
    %v157 = vadd.f32 %v154, %v156
    %v158 = vstv %s51
    %v159 = vadd.f32 %v157, %v158
    %v160 = vmax.f32 %v159, 0.0
    %v161 = vstv %s52
    %v162 = vmul.f32 %v128, %v161
    %v163 = vstv %s53
    %v164 = vmul.f32 %v136, %v163
    %v165 = vadd.f32 %v162, %v164
    %v166 = vstv %s54
    %v167 = vmul.f32 %v144, %v166
    %v168 = vadd.f32 %v165, %v167
    %v169 = vstv %s55
    %v170 = vmul.f32 %v152, %v169
    %v171 = vadd.f32 %v168, %v170
    %v172 = vstv %s56
    %v173 = vmul.f32 %v160, %v172
    %v174 = vadd.f32 %v171, %v173
    %v175 = vstv %s77
    %v176 = vadd.f32 %v174, %v175
    %v177 = vtanh.pop %v176
    %v178 = vstv %s57
    %v179 = vmul.f32 %v128, %v178
    %v180 = vstv %s58
    %v181 = vmul.f32 %v136, %v180
    %v182 = vadd.f32 %v179, %v181
    %v183 = vstv %s59
    %v184 = vmul.f32 %v144, %v183
    %v185 = vadd.f32 %v182, %v184
    %v186 = vstv %s60
    %v187 = vmul.f32 %v152, %v186
    %v188 = vadd.f32 %v185, %v187
    %v189 = vstv %s61
    %v190 = vmul.f32 %v160, %v189
    %v191 = vadd.f32 %v188, %v190
    %v192 = vstv %s78
    %v193 = vadd.f32 %v191, %v192
    %v194 = vtanh.pop %v193
    %v195 = vstv %s62
    %v196 = vmul.f32 %v128, %v195
    %v197 = vstv %s63
    %v198 = vmul.f32 %v136, %v197
    %v199 = vadd.f32 %v196, %v198
    %v200 = vstv %s64
    %v201 = vmul.f32 %v144, %v200
    %v202 = vadd.f32 %v199, %v201
    %v203 = vstv %s65
    %v204 = vmul.f32 %v152, %v203
    %v205 = vadd.f32 %v202, %v204
    %v206 = vstv %s66
    %v207 = vmul.f32 %v160, %v206
    %v208 = vadd.f32 %v205, %v207
    %v209 = vstv %s79
    %v210 = vadd.f32 %v208, %v209
    %v211 = vtanh.pop %v210
    %v212 = vstv %s67
    %v213 = vmul.f32 %v128, %v212
    %v214 = vstv %s68
    %v215 = vmul.f32 %v136, %v214
    %v216 = vadd.f32 %v213, %v215
    %v217 = vstv %s69
    %v218 = vmul.f32 %v144, %v217
    %v219 = vadd.f32 %v216, %v218
    %v220 = vstv %s70
    %v221 = vmul.f32 %v152, %v220
    %v222 = vadd.f32 %v219, %v221
    %v223 = vstv %s71
    %v224 = vmul.f32 %v160, %v223
    %v225 = vadd.f32 %v222, %v224
    %v226 = vstv %s80
    %v227 = vadd.f32 %v225, %v226
    %v228 = vtanh.pop %v227
    %v229 = vstv %s72
    %v230 = vmul.f32 %v128, %v229
    %v231 = vstv %s73
    %v232 = vmul.f32 %v136, %v231
    %v233 = vadd.f32 %v230, %v232
    %v234 = vstv %s74
    %v235 = vmul.f32 %v144, %v234
    %v236 = vadd.f32 %v233, %v235
    %v237 = vstv %s75
    %v238 = vmul.f32 %v152, %v237
    %v239 = vadd.f32 %v236, %v238
    %v240 = vstv %s76
    %v241 = vmul.f32 %v160, %v240
    %v242 = vadd.f32 %v239, %v241
    %v243 = vstv %s81
    %v244 = vadd.f32 %v242, %v243
    %v245 = vtanh.pop %v244
    %v246 = vstv %s82
    %v247 = vmul.f32 %v177, %v246
    %v248 = vstv %s83
    %v249 = vmul.f32 %v194, %v248
    %v250 = vadd.f32 %v247, %v249
    %v251 = vstv %s84
    %v252 = vmul.f32 %v211, %v251
    %v253 = vadd.f32 %v250, %v252
    %v254 = vstv %s85
    %v255 = vmul.f32 %v228, %v254
    %v256 = vadd.f32 %v253, %v255
    %v257 = vstv %s86
    %v258 = vmul.f32 %v245, %v257
    %v259 = vadd.f32 %v256, %v258
    %v260 = vstv %s107
    %v261 = vadd.f32 %v259, %v260
    %v262 = vmax.f32 %v261, 0.0
    %v263 = vstv %s87
    %v264 = vmul.f32 %v177, %v263
    %v265 = vstv %s88
    %v266 = vmul.f32 %v194, %v265
    %v267 = vadd.f32 %v264, %v266
    %v268 = vstv %s89
    %v269 = vmul.f32 %v211, %v268
    %v270 = vadd.f32 %v267, %v269
    %v271 = vstv %s90
    %v272 = vmul.f32 %v228, %v271
    %v273 = vadd.f32 %v270, %v272
    %v274 = vstv %s91
    %v275 = vmul.f32 %v245, %v274
    %v276 = vadd.f32 %v273, %v275
    %v277 = vstv %s108
    %v278 = vadd.f32 %v276, %v277
    %v279 = vmax.f32 %v278, 0.0
    %v280 = vstv %s92
    %v281 = vmul.f32 %v177, %v280
    %v282 = vstv %s93
    %v283 = vmul.f32 %v194, %v282
    %v284 = vadd.f32 %v281, %v283
    %v285 = vstv %s94
    %v286 = vmul.f32 %v211, %v285
    %v287 = vadd.f32 %v284, %v286
    %v288 = vstv %s95
    %v289 = vmul.f32 %v228, %v288
    %v290 = vadd.f32 %v287, %v289
    %v291 = vstv %s96
    %v292 = vmul.f32 %v245, %v291
    %v293 = vadd.f32 %v290, %v292
    %v294 = vstv %s109
    %v295 = vadd.f32 %v293, %v294
    %v296 = vmax.f32 %v295, 0.0
    %v297 = vstv %s97
    %v298 = vmul.f32 %v177, %v297
    %v299 = vstv %s98
    %v300 = vmul.f32 %v194, %v299
    %v301 = vadd.f32 %v298, %v300
    %v302 = vstv %s99
    %v303 = vmul.f32 %v211, %v302
    %v304 = vadd.f32 %v301, %v303
    %v305 = vstv %s100
    %v306 = vmul.f32 %v228, %v305
    %v307 = vadd.f32 %v304, %v306
    %v308 = vstv %s101
    %v309 = vmul.f32 %v245, %v308
    %v310 = vadd.f32 %v307, %v309
    %v311 = vstv %s110
    %v312 = vadd.f32 %v310, %v311
    %v313 = vmax.f32 %v312, 0.0
    %v314 = vstv %s102
    %v315 = vmul.f32 %v177, %v314
    %v316 = vstv %s103
    %v317 = vmul.f32 %v194, %v316
    %v318 = vadd.f32 %v315, %v317
    %v319 = vstv %s104
    %v320 = vmul.f32 %v211, %v319
    %v321 = vadd.f32 %v318, %v320
    %v322 = vstv %s105
    %v323 = vmul.f32 %v228, %v322
    %v324 = vadd.f32 %v321, %v323
    %v325 = vstv %s106
    %v326 = vmul.f32 %v245, %v325
    %v327 = vadd.f32 %v324, %v326
    %v328 = vstv %s111
    %v329 = vadd.f32 %v327, %v328
    %v330 = vmax.f32 %v329, 0.0
    %v331 = vstv %s112
    %v332 = vmul.f32 %v262, %v331
    %v333 = vstv %s113
    %v334 = vmul.f32 %v279, %v333
    %v335 = vadd.f32 %v332, %v334
    %v336 = vstv %s114
    %v337 = vmul.f32 %v296, %v336
    %v338 = vadd.f32 %v335, %v337
    %v339 = vstv %s115
    %v340 = vmul.f32 %v313, %v339
    %v341 = vadd.f32 %v338, %v340
    %v342 = vstv %s116
    %v343 = vmul.f32 %v330, %v342
    %v344 = vadd.f32 %v341, %v343
    %v345 = vstv %s117
    %v346 = vadd.f32 %v344, %v345
    %v347 = vmul.f32 %v346, 0.5
    %v348 = vtanh.pop %v347
    %v349 = vmul.f32 %v348, 0.5
    %v350 = vadd.f32 %v349, 0.5
    %351 = vst [vmem:[#allocation7] sm:$0xff] %v350
    // Predicated region
    $region18: #{tpu_custom_call.1} parent=1 // pred_check
      _
    $region19: #{tpu_custom_call.1} parent=1 // pred_check_branch
      %353 = sbr.rel (0) target = $region21
    $region20: #{tpu_custom_call.1} parent=1 // pred_region
      %s355 = ssub.s32 128, 128
      %356 = vsyncadd [#allocation4], %s355
      %s358 = sshll.u32 [#allocation7], 4
      %s359 = int_to_ptr.vmem [resolvable:$true] %s358
      %361 = dma.vmem_to_hbm [thread:$0]  %s359, 128, %s2, [#allocation4]
    $region21: #{tpu_custom_call.1} parent=1 // pred_fallthru
      _
    // Predicated region
    $region22: #{tpu_custom_call.1} parent=1 // pred_check
      _
    $region23: #{tpu_custom_call.1} parent=1 // pred_check_branch
      %363 = sbr.rel (0) target = $region25
    $region24: #{tpu_custom_call.1} parent=1 // pred_region
      %364 = dma.done [#allocation4], 128
    $region25: #{tpu_custom_call.1} parent=1 // pred_fallthru
      _
    %365 = vsyncpa [#allocation3], 1
    %366 = vsyncpa [#allocation4], 1
    %367 = vsyncpa [#allocation5], 1

</llo_original>
